<compile_context>
chip_gen: v6e
topology: v6e:2x2x1
jax: 0.10.0
libtpu: 0.0.40
codegen_flags: <defaults>
</compile_context>

<pallas_src>
import jax
import jax.numpy as jnp
from jax.experimental import pallas as pl
from jax.experimental.pallas import tpu as pltpu

D_IN, H1, H2, D_OUT = 3, 6, 15, 3
H2_PAD = 16          # 15 -> 16: layer-2 activations fill exactly 2 sublane groups
_MAX_TB = 32768      # working set ~4.5 MB f32 -> safely under v5e's 16 MiB scoped VMEM


def _round_up(n, m):
    return ((n + m - 1) // m) * m


def _next_pow2(n):
    return 1 << max(0, (int(n) - 1).bit_length())


def _mlp_kernel(x_ref, w1_ref, b1_ref, w2_ref, b2_ref, w3_ref, b3_ref, o_ref):
    # Whole (tiny) MLP in one kernel: 3 canonical MXU matmuls + 2 tanh (EUP)
    # + bias adds (VPU).  Batch on the lane axis => full-width vregs everywhere
    # and a lane-dense (3, tb) output store.
    x = x_ref[...]                                                          # (3,  tb)
    h1 = jnp.tanh(
        jnp.dot(w1_ref[...], x, preferred_element_type=jnp.float32) + b1_ref[...]
    )                                                                       # (6,  tb)
    h2 = jnp.tanh(
        jnp.dot(w2_ref[...], h1, preferred_element_type=jnp.float32) + b2_ref[...]
    )                                                                       # (16, tb)
    y = jnp.dot(w3_ref[...], h2, preferred_element_type=jnp.float32) + b3_ref[...]
    o_ref[...] = y.astype(o_ref.dtype)                                      # (3,  tb)


def net_forward(x, params):
    """x: (B, 3) float32.  params: w1(6,3), b1(6,1), w2(15,6), b2(15,1), w3(3,15), b3(3,1)."""
    B = x.shape[0]

    # Bucketed batch padding + lane-dense tile selection.
    if B <= _MAX_TB:
        B_pad = max(128, _next_pow2(B))
        # For buckets >= 256 force at least two grid steps so both v7x TCs get work.
        tb = B_pad if B_pad < 256 else B_pad // 2
    else:
        tb = _MAX_TB
        B_pad = _round_up(B, tb)

    w1, b1, w2, b2, w3, b3 = (params[k] for k in ("w1", "b1", "w2", "b2", "w3", "b3"))

    # Zero-pad hidden dim 15 -> 16; padded unit contributes tanh(0) * 0 = 0.
    w2p = jnp.pad(w2, ((0, H2_PAD - H2), (0, 0)))
    b2p = jnp.pad(b2, ((0, H2_PAD - H2), (0, 0)))
    w3p = jnp.pad(w3, ((0, 0), (0, H2_PAD - H2)))

    # Transpose + zero-pad the batch so batch lives on the lane axis.  The
    # allow_input_fusion hint lets XLA fuse this producer into the pallas_call
    # input rather than materializing a separate (3, B_pad) array in HBM.
    x_t = jnp.pad(x.astype(jnp.float32), ((0, B_pad - B), (0, 0))).T        # (3, B_pad)

    full = lambda shape: pl.BlockSpec(shape, lambda i: (0, 0))              # grid-invariant
    out_t = pl.pallas_call(
        _mlp_kernel,
        out_shape=jax.ShapeDtypeStruct((D_OUT, B_pad), jnp.float32),
        grid_spec=pl.GridSpec(
            grid=(B_pad // tb,),
            in_specs=[
                pl.BlockSpec((D_IN, tb), lambda i: (0, i)),   # x tile: batch on lanes
                full((H1, D_IN)),                             # w1
                full((H1, 1)),                                # b1
                full((H2_PAD, H1)),                           # w2 (padded)
                full((H2_PAD, 1)),                            # b2 (padded)
                full((D_OUT, H2_PAD)),                        # w3 (padded)
                full((D_OUT, 1)),                             # b3
            ],
            out_specs=pl.BlockSpec((D_OUT, tb), lambda i: (0, i)),
        ),
        compiler_params=pltpu.CompilerParams(
            dimension_semantics=("parallel",),                # shards grid across v7x's 2 TCs
            allow_input_fusion=[True, False, False, False, False, False, False],
        ),
    )(x_t, w1, b1, w2p, b2p, w3p, b3)

    # Padded batch columns (tanh of bias on zeros) are discarded here; keep this
    # slice if the layout is ever changed.
    return out_t[:, :B].T                                                   # (B, 3)


def init_params(key):
    """Deterministic init mimicking PyTorch Linear default: U[-1/sqrt(fan_in), +1/sqrt(fan_in)]."""
    ks = jax.random.split(key, 6)

    def linear(kw, kb, fan_in, fan_out):
        bound = 1.0 / jnp.sqrt(fan_in)
        # PyTorch layout: weight (out, in), bias stored as (out, 1) for lane broadcast.
        w = jax.random.uniform(kw, (fan_out, fan_in), jnp.float32, -bound, bound)
        b = jax.random.uniform(kb, (fan_out, 1), jnp.float32, -bound, bound)
        return w, b

    w1, b1 = linear(ks[0], ks[1], D_IN, H1)
    w2, b2 = linear(ks[2], ks[3], H1, H2)
    w3, b3 = linear(ks[4], ks[5], H2, D_OUT)
    return {"w1": w1, "b1": b1, "w2": w2, "b2": b2, "w3": w3, "b3": b3}


def reference_forward(x, p):
    h1 = jnp.tanh(x @ p["w1"].T + p["b1"][:, 0])
    h2 = jnp.tanh(h1 @ p["w2"].T + p["b2"][:, 0])
    return h2 @ p["w3"].T + p["b3"][:, 0]


if __name__ == "__main__":
    key = jax.random.PRNGKey(0)
    k_params, k_x = jax.random.split(key)

    params = init_params(k_params)
    x = jax.random.normal(k_x, (16, D_IN), jnp.float32)   # small batch of 16 samples

    fwd = jax.jit(net_forward)
    y = fwd(x, params)                  # B=16 -> bucketed to one lane-dense tile of 128
    y = jax.block_until_ready(y)

    y_ref = reference_forward(x, params)
    assert y.shape == (16, D_OUT)
    assert jnp.allclose(y, y_ref, atol=1e-5, rtol=1e-5), "mismatch vs JAX reference"

    print("KERNEL_OK")
</pallas_src>

<mosaic_0001>
module attributes {stable_mosaic.version = 11 : i64} {
  func.func @_mlp_kernel(%arg0: i32, %arg1: memref<3x128xf32, #tpu.memory_space<vmem>>, %arg2: memref<6x3xf32, #tpu.memory_space<vmem>>, %arg3: memref<6x1xf32, #tpu.memory_space<vmem>>, %arg4: memref<16x6xf32, #tpu.memory_space<vmem>>, %arg5: memref<16x1xf32, #tpu.memory_space<vmem>>, %arg6: memref<3x16xf32, #tpu.memory_space<vmem>>, %arg7: memref<3x1xf32, #tpu.memory_space<vmem>>, %arg8: memref<3x128xf32, #tpu.memory_space<vmem>>) attributes {dimension_semantics = [#tpu.dimension_semantics<parallel>], iteration_bounds = array<i64: 1>, scalar_prefetch = 0 : i64, scratch_operands = 0 : i64, tpu.core_type = #tpu.core_type<tc>, window_params = [{transform_indices = @transform_0, window_bounds = array<i64: 3, 128>}, {pipeline_mode = #tpu.pipeline_mode<synchronous>, transform_indices = @transform_1, window_bounds = array<i64: 6, 3>}, {pipeline_mode = #tpu.pipeline_mode<synchronous>, transform_indices = @transform_2, window_bounds = array<i64: 6, 1>}, {pipeline_mode = #tpu.pipeline_mode<synchronous>, transform_indices = @transform_3, window_bounds = array<i64: 16, 6>}, {pipeline_mode = #tpu.pipeline_mode<synchronous>, transform_indices = @transform_4, window_bounds = array<i64: 16, 1>}, {pipeline_mode = #tpu.pipeline_mode<synchronous>, transform_indices = @transform_5, window_bounds = array<i64: 3, 16>}, {pipeline_mode = #tpu.pipeline_mode<synchronous>, transform_indices = @transform_6, window_bounds = array<i64: 3, 1>}, {transform_indices = @transform_7, window_bounds = array<i64: 3, 128>}]} {
    %c0 = arith.constant 0 : index
    %c0_0 = arith.constant 0 : index
    %0 = vector.load %arg1[%c0, %c0_0] : memref<3x128xf32, #tpu.memory_space<vmem>>, vector<3x128xf32>
    %c0_1 = arith.constant 0 : index
    %c0_2 = arith.constant 0 : index
    %1 = vector.load %arg2[%c0_1, %c0_2] : memref<6x3xf32, #tpu.memory_space<vmem>>, vector<6x3xf32>
    %cst = arith.constant dense<0.000000e+00> : vector<6x128xf32>
    %2 = tpu.matmul %1, %0, %cst {dimension_numbers = #tpu.dot_dimension_numbers<[1], [0], [0], [1], [0, 0, 1, 1], [], []>} : vector<6x3xf32>, vector<3x128xf32>, vector<6x128xf32> -> vector<6x128xf32>
    %c0_3 = arith.constant 0 : index
    %c0_4 = arith.constant 0 : index
    %3 = vector.load %arg3[%c0_3, %c0_4] : memref<6x1xf32, #tpu.memory_space<vmem>>, vector<6x1xf32>
    %4 = vector.broadcast %3 : vector<6x1xf32> to vector<6x128xf32>
    %5 = arith.addf %2, %4 : vector<6x128xf32>
    %6 = math.tanh %5 : vector<6x128xf32>
    %c0_5 = arith.constant 0 : index
    %c0_6 = arith.constant 0 : index
    %7 = vector.load %arg4[%c0_5, %c0_6] : memref<16x6xf32, #tpu.memory_space<vmem>>, vector<16x6xf32>
    %cst_7 = arith.constant dense<0.000000e+00> : vector<16x128xf32>
    %8 = tpu.matmul %7, %6, %cst_7 {dimension_numbers = #tpu.dot_dimension_numbers<[1], [0], [0], [1], [0, 0, 1, 1], [], []>} : vector<16x6xf32>, vector<6x128xf32>, vector<16x128xf32> -> vector<16x128xf32>
    %c0_8 = arith.constant 0 : index
    %c0_9 = arith.constant 0 : index
    %9 = vector.load %arg5[%c0_8, %c0_9] : memref<16x1xf32, #tpu.memory_space<vmem>>, vector<16x1xf32>
    %10 = vector.broadcast %9 : vector<16x1xf32> to vector<16x128xf32>
    %11 = arith.addf %8, %10 : vector<16x128xf32>
    %12 = math.tanh %11 : vector<16x128xf32>
    %c0_10 = arith.constant 0 : index
    %c0_11 = arith.constant 0 : index
    %13 = vector.load %arg6[%c0_10, %c0_11] : memref<3x16xf32, #tpu.memory_space<vmem>>, vector<3x16xf32>
    %cst_12 = arith.constant dense<0.000000e+00> : vector<3x128xf32>
    %14 = tpu.matmul %13, %12, %cst_12 {dimension_numbers = #tpu.dot_dimension_numbers<[1], [0], [0], [1], [0, 0, 1, 1], [], []>} : vector<3x16xf32>, vector<16x128xf32>, vector<3x128xf32> -> vector<3x128xf32>
    %c0_13 = arith.constant 0 : index
    %c0_14 = arith.constant 0 : index
    %15 = vector.load %arg7[%c0_13, %c0_14] : memref<3x1xf32, #tpu.memory_space<vmem>>, vector<3x1xf32>
    %16 = vector.broadcast %15 : vector<3x1xf32> to vector<3x128xf32>
    %17 = arith.addf %14, %16 : vector<3x128xf32>
    %c0_15 = arith.constant 0 : index
    %c0_16 = arith.constant 0 : index
    %18 = vector.load %arg8[%c0_15, %c0_16] : memref<3x128xf32, #tpu.memory_space<vmem>>, vector<3x128xf32>
    tpu.vector_store %arg8[%c0_15, %c0_16], %17 {strides = array<i32>} : memref<3x128xf32, #tpu.memory_space<vmem>>, vector<3x128xf32>,
    return
  }
  func.func @transform_0(%arg0: i32) -> (i32, i32) {
    %c0_i32 = arith.constant 0 : i32
    %c0_i32_0 = arith.constant 0 : i32
    return %c0_i32, %arg0 : i32, i32
  }
  func.func @transform_1(%arg0: i32) -> (i32, i32) {
    %c0_i32 = arith.constant 0 : i32
    %c0_i32_0 = arith.constant 0 : i32
    %c0_i32_1 = arith.constant 0 : i32
    return %c0_i32, %c0_i32_0 : i32, i32
  }
  func.func @transform_2(%arg0: i32) -> (i32, i32) {
    %c0_i32 = arith.constant 0 : i32
    %c0_i32_0 = arith.constant 0 : i32
    %c0_i32_1 = arith.constant 0 : i32
    return %c0_i32, %c0_i32_0 : i32, i32
  }
  func.func @transform_3(%arg0: i32) -> (i32, i32) {
    %c0_i32 = arith.constant 0 : i32
    %c0_i32_0 = arith.constant 0 : i32
    %c0_i32_1 = arith.constant 0 : i32
    return %c0_i32, %c0_i32_0 : i32, i32
  }
  func.func @transform_4(%arg0: i32) -> (i32, i32) {
    %c0_i32 = arith.constant 0 : i32
    %c0_i32_0 = arith.constant 0 : i32
    %c0_i32_1 = arith.constant 0 : i32
    return %c0_i32, %c0_i32_0 : i32, i32
  }
  func.func @transform_5(%arg0: i32) -> (i32, i32) {
    %c0_i32 = arith.constant 0 : i32
    %c0_i32_0 = arith.constant 0 : i32
    %c0_i32_1 = arith.constant 0 : i32
    return %c0_i32, %c0_i32_0 : i32, i32
  }
  func.func @transform_6(%arg0: i32) -> (i32, i32) {
    %c0_i32 = arith.constant 0 : i32
    %c0_i32_0 = arith.constant 0 : i32
    %c0_i32_1 = arith.constant 0 : i32
    return %c0_i32, %c0_i32_0 : i32, i32
  }
  func.func @transform_7(%arg0: i32) -> (i32, i32) {
    %c0_i32 = arith.constant 0 : i32
    %c0_i32_0 = arith.constant 0 : i32
    return %c0_i32, %arg0 : i32, i32
  }
}

</mosaic_0001>

<llo_original>
// kernel: net_forward.2
$region0: #{net_forward.2}
  #allocation0 [shape = 'u32[]', space=smem, size = 0x4, offset = 0x4, fixed_abs, tag = 'smem constant byte address 0x4 - core index']
  #allocation1 [shape = 'u32[144,128]{1,0:T(1,128)}', space=vmem, size = 0x12000, scoped, tag = 'internal scratch']
  #allocation2 [shape = 'u32[2048]{0}', space=vmem, size = 0x2000, scoped, tag = 'scoped memory for net_forward.2']
  #allocation3 [shape = 'u32[2048]{0}', space=vmem, size = 0x2000, scoped, tag = 'scoped memory for net_forward.2']
  #allocation4 [shape = 'u32[2048]{0}', space=vmem, size = 0x2000, scoped, tag = 'scoped memory for net_forward.2']
  #allocation5 [shape = 'u32[2048]{0}', space=vmem, size = 0x2000, scoped, tag = 'scoped memory for net_forward.2']
  #allocation6 [shape = 'u32[2048]{0}', space=vmem, size = 0x2000, scoped, tag = 'scoped memory for net_forward.2']
  %s0 = inlined_call_operand.vmem [shape: f32[6,3], index: 0, kind: input, shape index: {}]
  %s1 = inlined_call_operand.vmem [shape: f32[6,1], index: 1, kind: input, shape index: {}]
  %s2 = inlined_call_operand.vmem [shape: f32[16,6], index: 2, kind: input, shape index: {}]
  %s3 = inlined_call_operand.vmem [shape: f32[16,1], index: 3, kind: input, shape index: {}]
  %s4 = inlined_call_operand.vmem [shape: f32[3,16], index: 4, kind: input, shape index: {}]
  %s5 = inlined_call_operand.vmem [shape: f32[3,1], index: 5, kind: input, shape index: {}]
  %s6 = inlined_call_operand.vmem [shape: f32[16,3], index: 6, kind: input, shape index: {}]
  %s7 = inlined_call_operand.<no memory space> [shape: f32[], index: 7, kind: input, shape index: {}]
  %s8 = inlined_call_operand.vmem [shape: f32[3,128], index: 8, kind: output, shape index: {}]
  %s9 = sld [smem:[#allocation0]]
  $region38: #{net_forward.2} parent=0
    _
  %s11 = ssub.s32 1, %s9
  %s12 = scalar_select 0, %s11, %s9
  %v13 = vstv %s7
  $region1: #{net_forward.2} parent=0
    #allocation7 [shape = 'u8[2048]{0}', space=vmem, size = 0x800, dematerialized = true, scoped, tag = 'FusionAdapter Buffer %fusion.1 = f32[3,128]{1,0:T(4,128)} fusion(%param_6.2, %param_7), kind=kLoop, calls=%fused_computation.1.clone, metadata={op_name="jit(net_forward)/transpose" stack_frame_id=11}']
    // Predicated region
    $region2: #{net_forward.2} parent=1 // pred_check
      _
    $region3: #{net_forward.2} parent=1 // pred_check_branch
      %15 = sbr.rel (0) target = $region5
    $region4: #{net_forward.2} parent=1 // pred_region
      _
    $region5: #{net_forward.2} parent=1 // pred_fallthru
      _
    // Predicated region
    $region6: #{net_forward.2} parent=1 // pred_check
      _
    $region7: #{net_forward.2} parent=1 // pred_check_branch
      %17 = sbr.rel (0) target = $region9
    $region8: #{net_forward.2} parent=1 // pred_region
      _
    $region9: #{net_forward.2} parent=1 // pred_fallthru
      _
    // Predicated region
    $region10: #{net_forward.2} parent=1 // pred_check
      _
    $region11: #{net_forward.2} parent=1 // pred_check_branch
      %19 = sbr.rel (0) target = $region13
    $region12: #{net_forward.2} parent=1 // pred_region
      _
    $region13: #{net_forward.2} parent=1 // pred_fallthru
      _
    // Predicated region
    $region14: #{net_forward.2} parent=1 // pred_check
      _
    $region15: #{net_forward.2} parent=1 // pred_check_branch
      %21 = sbr.rel (0) target = $region17
    $region16: #{net_forward.2} parent=1 // pred_region
      _
    $region17: #{net_forward.2} parent=1 // pred_fallthru
      _
    // Predicated region
    $region18: #{net_forward.2} parent=1 // pred_check
      _
    $region19: #{net_forward.2} parent=1 // pred_check_branch
      %23 = sbr.rel (0) target = $region21
    $region20: #{net_forward.2} parent=1 // pred_region
      _
    $region21: #{net_forward.2} parent=1 // pred_fallthru
      _
    // Predicated region
    $region22: #{net_forward.2} parent=1 // pred_check
      _
    $region23: #{net_forward.2} parent=1 // pred_check_branch
      %25 = sbr.rel (0) target = $region25
    $region24: #{net_forward.2} parent=1 // pred_region
      _
    $region25: #{net_forward.2} parent=1 // pred_fallthru
      _
    // Predicated region
    $region26: #{net_forward.2} parent=1 // pred_check
      _
    $region27: #{net_forward.2} parent=1 // pred_check_branch
      %27 = sbr.rel (0) target = $region29
    $region28: #{net_forward.2} parent=1 // pred_region
      _
    $region29: #{net_forward.2} parent=1 // pred_fallthru
      _
    %v28 = vld [vmem:[%s6] sm:$0x7]
    %v29 = vlaneseq
    %v30 = vshrl.u32 %v29, 7
    %vm32 = vcmp.lt.s32.totalorder %v30, 3
    %v33 = vsel %vm32, %v28, %v13
    %v34 = vlaneseq
    %v35 = vand.u32 %v34, 127
    %vm37 = vcmp.lt.s32.totalorder %v35, 16
    %v38 = vsel %vm37, %v33, %v13
    %s40 = ssub.s32 16, 1
    %41 = vst [vmem:[#allocation7] sm:%s40] %v38
    %v42 = vld [vmem:[#allocation7] sm:$0x7]
    %v43 = vld [vmem:[%s0] sm:$0x3f]
    %v44 = vld [vmem:[%s1] sm:$0x3f]
    %46 = vset.pattern.permute.xlu0 0
    %47 = vperm.xlu0 %46, %v44
    %v48 = vpop.permute.xlu0 %47
    %vm50 = vcmask 23552
    %v52 = vsel %vm50, %v43, 0
    %vm54 = vcmask 1042432
    %v56 = vsel %vm54, %v42, 0
    %58 = vmatprep.subr.mxu0 0.0
    %59 = vmatpush1.msra.mxu0 0.0
    %60 = vmatprep.subr.mxu0 0.0
    %61 = vmatpush1.msra.mxu0 0.0
    %62 = vmatprep.subr.mxu0 0.0
    %63 = vmatpush1.msra.mxu0 0.0
    %64 = vmatprep.subr.mxu0 0.0
    %65 = vmatpush1.msra.mxu0 0.0
    %66 = vmatprep.subr.mxu0 0.0
    %67 = vmatpush1.msra.mxu0 0.0
    %68 = vmatprep.subr.mxu0 0.0
    %69 = vmatpush1.msra.mxu0 0.0
    %70 = vmatprep.subr.mxu0 0.0
    %71 = vmatpush1.msra.mxu0 0.0
    %72 = vmatprep.subr.mxu0 0.0
    %73 = vmatpush1.msra.mxu0 0.0
    %74 = vmatprep.subr.mxu0 0.0
    %75 = vmatpush1.msra.mxu0 0.0
    %76 = vmatprep.subr.mxu0 0.0
    %77 = vmatpush1.msra.mxu0 0.0
    %78 = vmatprep.subr.mxu0 0.0
    %79 = vmatpush1.msra.mxu0 0.0
    %80 = vmatprep.subr.mxu0 0.0
    %81 = vmatpush1.msra.mxu0 0.0
    %82 = vmatprep.subr.mxu0 0.0
    %83 = vmatpush1.msra.mxu0 0.0
    %84 = vmatprep.subr.mxu0 0.0
    %85 = vmatpush1.msra.mxu0 0.0
    %86 = vmatprep.subr.mxu0 0.0
    %87 = vmatpush1.msra.mxu0 0.0
    %88 = vmatprep.subr.mxu0 0.0
    %89 = vmatpush1.msra.mxu0 %v56
    %90 = vmatprep.subr.mxu0 0.0
    %91 = vmatpush2.msra.mxu0 0.0
    %92 = vmatprep.subr.mxu0 0.0
    %93 = vmatpush2.msra.mxu0 0.0
    %94 = vmatprep.subr.mxu0 0.0
    %95 = vmatpush2.msra.mxu0 0.0
    %96 = vmatprep.subr.mxu0 0.0
    %97 = vmatpush2.msra.mxu0 0.0
    %98 = vmatprep.subr.mxu0 0.0
    %99 = vmatpush2.msra.mxu0 0.0
    %100 = vmatprep.subr.mxu0 0.0
    %101 = vmatpush2.msra.mxu0 0.0
    %102 = vmatprep.subr.mxu0 0.0
    %103 = vmatpush2.msra.mxu0 0.0
    %104 = vmatprep.subr.mxu0 0.0
    %105 = vmatpush2.msra.mxu0 0.0
    %106 = vmatprep.subr.mxu0 0.0
    %107 = vmatpush2.msra.mxu0 0.0
    %108 = vmatprep.subr.mxu0 0.0
    %109 = vmatpush2.msra.mxu0 0.0
    %110 = vmatprep.subr.mxu0 0.0
    %111 = vmatpush2.msra.mxu0 0.0
    %112 = vmatprep.subr.mxu0 0.0
    %113 = vmatpush2.msra.mxu0 0.0
    %114 = vmatprep.subr.mxu0 0.0
    %115 = vmatpush2.msra.mxu0 0.0
    %116 = vmatprep.subr.mxu0 0.0
    %117 = vmatpush2.msra.mxu0 0.0
    %118 = vmatprep.subr.mxu0 0.0
    %119 = vmatpush2.msra.mxu0 0.0
    %120 = vmatprep.subr.mxu0 0.0
    %121 = vmatpush2.msra.mxu0 0.0
    %122 = vmatprep.mubr.f32.mxu0 0.0
    %123 = vmatmul.mubr.f32.gmra.mxu0 %v52
    %v124 = vpop.f32.mrf.mxu0
    %v125 = vadd.f32 %v48, %v124
    %v126 = vpop.f32.mrf.mxu0
    %127 = vdwg.mxu0
    %v128 = vtanh.pop %v125
    %v129 = vld [vmem:[%s2] sm:$0xff]
    %v130 = vld [vmem:[%s2 + $0x8] sm:$0xff]
    %v131 = vld [vmem:[%s3] sm:$0xff]
    %v132 = vld [vmem:[%s3 + $0x8] sm:$0xff]
    %134 = vset.pattern.permute.xlu0 0
    %135 = vperm.xlu0 %134, %v131
    %v136 = vpop.permute.xlu0 %135
    %139 = vset.pattern.permute.xlu0 0
    %140 = vperm.xlu0 %139, %v132
    %v141 = vpop.permute.xlu0 %140
    %vm143 = vcmask 48128
    %v145 = vsel %vm143, %v129, 0
    %v148 = vsel %vm143, %v130, 0
    %vm150 = vcmask 1045504
    %v152 = vsel %vm150, %v128, 0
    %154 = vmatprep.subr.mxu0 0.0
    %155 = vmatpush1.msra.mxu0 0.0
    %156 = vmatprep.subr.mxu0 0.0
    %157 = vmatpush1.msra.mxu0 0.0
    %158 = vmatprep.subr.mxu0 0.0
    %159 = vmatpush1.msra.mxu0 0.0
    %160 = vmatprep.subr.mxu0 0.0
    %161 = vmatpush1.msra.mxu0 0.0
    %162 = vmatprep.subr.mxu0 0.0
    %163 = vmatpush1.msra.mxu0 0.0
    %164 = vmatprep.subr.mxu0 0.0
    %165 = vmatpush1.msra.mxu0 0.0
    %166 = vmatprep.subr.mxu0 0.0
    %167 = vmatpush1.msra.mxu0 0.0
    %168 = vmatprep.subr.mxu0 0.0
    %169 = vmatpush1.msra.mxu0 0.0
    %170 = vmatprep.subr.mxu0 0.0
    %171 = vmatpush1.msra.mxu0 0.0
    %172 = vmatprep.subr.mxu0 0.0
    %173 = vmatpush1.msra.mxu0 0.0
    %174 = vmatprep.subr.mxu0 0.0
    %175 = vmatpush1.msra.mxu0 0.0
    %176 = vmatprep.subr.mxu0 0.0
    %177 = vmatpush1.msra.mxu0 0.0
    %178 = vmatprep.subr.mxu0 0.0
    %179 = vmatpush1.msra.mxu0 0.0
    %180 = vmatprep.subr.mxu0 0.0
    %181 = vmatpush1.msra.mxu0 0.0
    %182 = vmatprep.subr.mxu0 0.0
    %183 = vmatpush1.msra.mxu0 0.0
    %184 = vmatprep.subr.mxu0 0.0
    %185 = vmatpush1.msra.mxu0 %v152
    %186 = vmatprep.subr.mxu0 0.0
    %187 = vmatpush2.msra.mxu0 0.0
    %188 = vmatprep.subr.mxu0 0.0
    %189 = vmatpush2.msra.mxu0 0.0
    %190 = vmatprep.subr.mxu0 0.0
    %191 = vmatpush2.msra.mxu0 0.0
    %192 = vmatprep.subr.mxu0 0.0
    %193 = vmatpush2.msra.mxu0 0.0
    %194 = vmatprep.subr.mxu0 0.0
    %195 = vmatpush2.msra.mxu0 0.0
    %196 = vmatprep.subr.mxu0 0.0
    %197 = vmatpush2.msra.mxu0 0.0
    %198 = vmatprep.subr.mxu0 0.0
    %199 = vmatpush2.msra.mxu0 0.0
    %200 = vmatprep.subr.mxu0 0.0
    %201 = vmatpush2.msra.mxu0 0.0
    %202 = vmatprep.subr.mxu0 0.0
    %203 = vmatpush2.msra.mxu0 0.0
    %204 = vmatprep.subr.mxu0 0.0
    %205 = vmatpush2.msra.mxu0 0.0
    %206 = vmatprep.subr.mxu0 0.0
    %207 = vmatpush2.msra.mxu0 0.0
    %208 = vmatprep.subr.mxu0 0.0
    %209 = vmatpush2.msra.mxu0 0.0
    %210 = vmatprep.subr.mxu0 0.0
    %211 = vmatpush2.msra.mxu0 0.0
    %212 = vmatprep.subr.mxu0 0.0
    %213 = vmatpush2.msra.mxu0 0.0
    %214 = vmatprep.subr.mxu0 0.0
    %215 = vmatpush2.msra.mxu0 0.0
    %216 = vmatprep.subr.mxu0 0.0
    %217 = vmatpush2.msra.mxu0 0.0
    %218 = vmatprep.mubr.f32.mxu0 0.0
    %219 = vmatmul.mubr.f32.gmra.mxu0 %v145
    %v220 = vpop.f32.mrf.mxu0
    %v221 = vadd.f32 %v136, %v220
    %v222 = vpop.f32.mrf.mxu0
    %223 = vmatprep.mubr.f32.mxu0 0.0
    %224 = vmatmul.mubr.f32.gmra.mxu0 %v148
    %v225 = vpop.f32.mrf.mxu0
    %v226 = vadd.f32 %v141, %v225
    %v227 = vpop.f32.mrf.mxu0
    %228 = vdwg.mxu0
    %v229 = vtanh.pop %v221
    %v230 = vtanh.pop %v226
    %v231 = vld [vmem:[%s4] sm:$0x7]
    %v232 = vld [vmem:[%s5] sm:$0x7]
    %234 = vset.pattern.permute.xlu0 0
    %235 = vperm.xlu0 %234, %v232
    %v236 = vpop.permute.xlu0 %235
    %vm238 = vcmask 130048
    %v240 = vsel %vm238, %v231, 0
    %242 = vmatprep.subr.mxu0 0.0
    %243 = vmatpush1.msra.mxu0 0.0
    %244 = vmatprep.subr.mxu0 0.0
    %245 = vmatpush1.msra.mxu0 0.0
    %246 = vmatprep.subr.mxu0 0.0
    %247 = vmatpush1.msra.mxu0 0.0
    %248 = vmatprep.subr.mxu0 0.0
    %249 = vmatpush1.msra.mxu0 0.0
    %250 = vmatprep.subr.mxu0 0.0
    %251 = vmatpush1.msra.mxu0 0.0
    %252 = vmatprep.subr.mxu0 0.0
    %253 = vmatpush1.msra.mxu0 0.0
    %254 = vmatprep.subr.mxu0 0.0
    %255 = vmatpush1.msra.mxu0 0.0
    %256 = vmatprep.subr.mxu0 0.0
    %257 = vmatpush1.msra.mxu0 0.0
    %258 = vmatprep.subr.mxu0 0.0
    %259 = vmatpush1.msra.mxu0 0.0
    %260 = vmatprep.subr.mxu0 0.0
    %261 = vmatpush1.msra.mxu0 0.0
    %262 = vmatprep.subr.mxu0 0.0
    %263 = vmatpush1.msra.mxu0 0.0
    %264 = vmatprep.subr.mxu0 0.0
    %265 = vmatpush1.msra.mxu0 0.0
    %266 = vmatprep.subr.mxu0 0.0
    %267 = vmatpush1.msra.mxu0 0.0
    %268 = vmatprep.subr.mxu0 0.0
    %269 = vmatpush1.msra.mxu0 0.0
    %270 = vmatprep.subr.mxu0 0.0
    %271 = vmatpush1.msra.mxu0 %v230
    %272 = vmatprep.subr.mxu0 0.0
    %273 = vmatpush1.msra.mxu0 %v229
    %274 = vmatprep.subr.mxu0 0.0
    %275 = vmatpush2.msra.mxu0 0.0
    %276 = vmatprep.subr.mxu0 0.0
    %277 = vmatpush2.msra.mxu0 0.0
    %278 = vmatprep.subr.mxu0 0.0
    %279 = vmatpush2.msra.mxu0 0.0
    %280 = vmatprep.subr.mxu0 0.0
    %281 = vmatpush2.msra.mxu0 0.0
    %282 = vmatprep.subr.mxu0 0.0
    %283 = vmatpush2.msra.mxu0 0.0
    %284 = vmatprep.subr.mxu0 0.0
    %285 = vmatpush2.msra.mxu0 0.0
    %286 = vmatprep.subr.mxu0 0.0
    %287 = vmatpush2.msra.mxu0 0.0
    %288 = vmatprep.subr.mxu0 0.0
    %289 = vmatpush2.msra.mxu0 0.0
    %290 = vmatprep.subr.mxu0 0.0
    %291 = vmatpush2.msra.mxu0 0.0
    %292 = vmatprep.subr.mxu0 0.0
    %293 = vmatpush2.msra.mxu0 0.0
    %294 = vmatprep.subr.mxu0 0.0
    %295 = vmatpush2.msra.mxu0 0.0
    %296 = vmatprep.subr.mxu0 0.0
    %297 = vmatpush2.msra.mxu0 0.0
    %298 = vmatprep.subr.mxu0 0.0
    %299 = vmatpush2.msra.mxu0 0.0
    %300 = vmatprep.subr.mxu0 0.0
    %301 = vmatpush2.msra.mxu0 0.0
    %302 = vmatprep.subr.mxu0 0.0
    %303 = vmatpush2.msra.mxu0 0.0
    %304 = vmatprep.subr.mxu0 0.0
    %305 = vmatpush2.msra.mxu0 0.0
    %306 = vmatprep.mubr.f32.mxu0 0.0
    %307 = vmatmul.mubr.f32.gmra.mxu0 %v240
    %v308 = vpop.f32.mrf.mxu0
    %v309 = vadd.f32 %v236, %v308
    %v310 = vpop.f32.mrf.mxu0
    %311 = vdwg.mxu0
    %312 = vst [vmem:[%s8] sm:$0x7] %v309
    // Predicated region
    $region30: #{net_forward.2} parent=1 // pred_check
      _
    $region31: #{net_forward.2} parent=1 // pred_check_branch
      %314 = sbr.rel (0) target = $region33
    $region32: #{net_forward.2} parent=1 // pred_region
      _
    $region33: #{net_forward.2} parent=1 // pred_fallthru
      _
    // Predicated region
    $region34: #{net_forward.2} parent=1 // pred_check
      _
    $region35: #{net_forward.2} parent=1 // pred_check_branch
      %316 = sbr.rel (0) target = $region37
    $region36: #{net_forward.2} parent=1 // pred_region
      _
    $region37: #{net_forward.2} parent=1 // pred_fallthru
      _

</llo_original>
